<compile_context>
chip_gen: v7x
topology: tpu7x:2x2x1
jax: 0.10.0
libtpu: 0.0.40
codegen_flags: <defaults>
</compile_context>

<pallas_src>
import jax
import jax.numpy as jnp
from jax.experimental import pallas as pl
from jax.experimental.pallas import tpu as pltpu


def _conv_transpose_kernel(pmat_ref, w_ref, b_ref, o_ref):
    # pmat_ref: (K, OHW)    lane-dense im2col patch matrix for this batch
    # w_ref:    (O, K)      conv-equivalent (flipped) weights
    # b_ref:    (O, 1)      bias column (broadcasts across lanes)
    # o_ref:    (1, O, OHW) lane-dense output slab (pure reshape of NCHW)
    #
    # TODO(synk): cast w/pmat to bf16 here (keep preferred_element_type=f32)
    # on v6e/v7x once K=KH*KW*C and O grow toward MXU-bound sizes.
    acc = jnp.dot(w_ref[...], pmat_ref[...],
                  preferred_element_type=jnp.float32)          # (O, OHW)
    o_ref[0, :, :] = (acc + b_ref[...]).astype(o_ref.dtype)


def transpose_conv(x_nchw, weight, bias, *, stride, padding, output_padding=0):
    """nn.ConvTranspose2d(inp, out, k, stride, padding, output_padding) forward.

    x_nchw : (N, C, H, W)
    weight : (C, O, KH, KW)   (PyTorch ConvTranspose2d layout)
    bias   : (O,)
    returns: (N, O, OH, OW)
    """
    n, c, h, w = x_nchw.shape
    c2, o, kh, kw = weight.shape
    assert c2 == c
    assert 0 <= output_padding < max(stride, 1)
    # TODO(synk): padding > k-1 would need output cropping instead of pad.
    assert kh - 1 - padding >= 0 and kw - 1 - padding >= 0

    oh = (h - 1) * stride - 2 * padding + kh + output_padding
    ow = (w - 1) * stride - 2 * padding + kw + output_padding
    ohw = oh * ow

    # --- glue: zero-dilate + edge-pad (one lax.pad with interior padding) ---
    ph = kh - 1 - padding
    pw = kw - 1 - padding
    x_pad = jax.lax.pad(
        x_nchw, jnp.array(0, x_nchw.dtype),
        [(0, 0, 0), (0, 0, 0),
         (ph, ph + output_padding, stride - 1),
         (pw, pw + output_padding, stride - 1)])
    hp, wp = x_pad.shape[2], x_pad.shape[3]
    assert hp - kh + 1 == oh and wp - kw + 1 == ow

    # --- glue: im2col hoisted into the wrapper -> lane-dense (K, N*OH*OW).
    # K ordering is (c, i, j); M ordering is (n, oh, ow).
    taps = [x_pad[:, :, i:i + oh, j:j + ow]                  # (N, C, OH, OW)
            for i in range(kh) for j in range(kw)]
    patches = jnp.stack(taps, axis=0)                        # (KH*KW, N, C, OH, OW)
    pmat = jnp.transpose(patches, (2, 0, 1, 3, 4))           # (C, KH*KW, N, OH, OW)
    pmat = pmat.reshape(c * kh * kw, n * ohw)                # (K, M)

    # Equivalent stride-1 conv weights: flip spatially, swap in/out channels,
    # flatten to (O, K) with the same (c, i, j) K-ordering as pmat.
    w_flip = weight[:, :, ::-1, ::-1]                        # (C, O, KH, KW)
    w_ok = jnp.transpose(w_flip, (1, 0, 2, 3)).reshape(o, c * kh * kw)
    b_col = bias.reshape(o, 1)                               # (O, 1)

    k_dim = c * kh * kw
    m = n * ohw
    itemsize = jnp.dtype(x_nchw.dtype).itemsize
    cost = pl.CostEstimate(
        flops=2 * m * k_dim * o,
        transcendentals=0,
        bytes_accessed=(pmat.size + w_ok.size + o + n * o * ohw) * itemsize)

    out_flat = pl.pallas_call(
        _conv_transpose_kernel,
        out_shape=jax.ShapeDtypeStruct((n, o, ohw), x_nchw.dtype),
        grid_spec=pltpu.PrefetchScalarGridSpec(
            num_scalar_prefetch=0,
            grid=(n,),                                       # halo-free batch split
            in_specs=[
                pl.BlockSpec((k_dim, ohw), lambda b: (0, b)),  # per-batch pmat block
                pl.BlockSpec((o, k_dim), lambda b: (0, 0)),    # weights (resident)
                pl.BlockSpec((o, 1), lambda b: (0, 0)),        # bias (resident)
            ],
            out_specs=pl.BlockSpec((1, o, ohw), lambda b: (b, 0, 0)),
        ),
        compiler_params=pltpu.CompilerParams(
            dimension_semantics=("parallel",),               # both v7x TCs usable
            vmem_limit_bytes=32 * 1024 * 1024,               # safe on v5e/v6e/v7x
        ),
        cost_estimate=cost,
    )(pmat, w_ok, b_col)

    # TODO(synk): at production H/W add a second grid axis over OH row bands
    # (block (k_dim, band*OW) of pmat) so blocks stay within v7x's 64 MiB VMEM.
    return out_flat.reshape(n, o, oh, ow)                    # free reshape to NCHW


def _reference(x, weight, bias, *, stride, padding, output_padding):
    """Independent scatter-add reference for ConvTranspose2d (PyTorch semantics)."""
    n, c, h, w = x.shape
    _, o, kh, kw = weight.shape
    oh = (h - 1) * stride - 2 * padding + kh + output_padding
    ow = (w - 1) * stride - 2 * padding + kw + output_padding
    contrib = jnp.einsum('nchw,cokl->nohwkl', x, weight,
                         precision=jax.lax.Precision.HIGHEST)
    full_h = (h - 1) * stride + kh
    full_w = (w - 1) * stride + kw
    rows = (jnp.arange(h) * stride)[:, None, None, None] + jnp.arange(kh)[None, None, :, None]
    cols = (jnp.arange(w) * stride)[None, :, None, None] + jnp.arange(kw)[None, None, None, :]
    rows = jnp.broadcast_to(rows, (h, w, kh, kw))
    cols = jnp.broadcast_to(cols, (h, w, kh, kw))
    y_full = jnp.zeros((n, o, full_h, full_w), x.dtype)
    y_full = y_full.at[:, :, rows, cols].add(contrib)
    if output_padding:
        y_full = jnp.pad(y_full, ((0, 0), (0, 0),
                                  (0, output_padding), (0, output_padding)))
    y = y_full[:, :, padding:padding + oh, padding:padding + ow]
    return y + bias[None, :, None, None]


if __name__ == "__main__":
    # TransposeConv(inp=4, out=8, kernel_size=4, stride=2, padding=1, out_padding=0)
    N, C, H, W = 2, 4, 16, 16
    O, KH, KW = 8, 4, 4
    stride, padding, out_padding = 2, 1, 0

    key = jax.random.PRNGKey(0)
    kx, kw_, kb = jax.random.split(key, 3)
    x = jax.random.normal(kx, (N, C, H, W), dtype=jnp.float32)
    fan = C * KH * KW
    weight = jax.random.normal(kw_, (C, O, KH, KW), dtype=jnp.float32) / jnp.sqrt(fan)
    bias = jax.random.normal(kb, (O,), dtype=jnp.float32) * 0.1

    out = transpose_conv(x, weight, bias, stride=stride, padding=padding,
                         output_padding=out_padding)
    out = jax.block_until_ready(out)

    ref = _reference(x, weight, bias, stride=stride, padding=padding,
                     output_padding=out_padding)
    OH = (H - 1) * stride - 2 * padding + KH + out_padding
    OW = (W - 1) * stride - 2 * padding + KW + out_padding
    assert out.shape == (N, O, OH, OW), out.shape
    max_err = float(jnp.max(jnp.abs(out - ref)))
    assert jnp.allclose(out, ref, atol=1e-4, rtol=1e-4), max_err

    print("KERNEL_OK")
</pallas_src>

<mosaic_0001>
module attributes {stable_mosaic.version = 11 : i64} {
  func.func @_conv_transpose_kernel(%arg0: i32, %arg1: memref<64x1024xf32, #tpu.memory_space<vmem>>, %arg2: memref<8x64xf32, #tpu.memory_space<vmem>>, %arg3: memref<8x1xf32, #tpu.memory_space<vmem>>, %arg4: memref<1x8x1024xf32, #tpu.memory_space<vmem>>) attributes {dimension_semantics = [#tpu.dimension_semantics<parallel>], iteration_bounds = array<i64: 2>, scalar_prefetch = 0 : i64, scratch_operands = 0 : i64, tpu.core_type = #tpu.core_type<tc>, window_params = [{transform_indices = @transform_0, window_bounds = array<i64: 64, 1024>}, {pipeline_mode = #tpu.pipeline_mode<synchronous>, transform_indices = @transform_1, window_bounds = array<i64: 8, 64>}, {pipeline_mode = #tpu.pipeline_mode<synchronous>, transform_indices = @transform_2, window_bounds = array<i64: 8, 1>}, {transform_indices = @transform_3, window_bounds = array<i64: 1, 8, 1024>}]} {
    %c0 = arith.constant 0 : index
    %c0_0 = arith.constant 0 : index
    %0 = vector.load %arg2[%c0, %c0_0] : memref<8x64xf32, #tpu.memory_space<vmem>>, vector<8x64xf32>
    %c0_1 = arith.constant 0 : index
    %c0_2 = arith.constant 0 : index
    %1 = vector.load %arg1[%c0_1, %c0_2] : memref<64x1024xf32, #tpu.memory_space<vmem>>, vector<64x1024xf32>
    %cst = arith.constant dense<0.000000e+00> : vector<8x1024xf32>
    %2 = tpu.matmul %0, %1, %cst {dimension_numbers = #tpu.dot_dimension_numbers<[1], [0], [0], [1], [0, 0, 1, 1], [], []>} : vector<8x64xf32>, vector<64x1024xf32>, vector<8x1024xf32> -> vector<8x1024xf32>
    %c0_3 = arith.constant 0 : index
    %c0_4 = arith.constant 0 : index
    %3 = vector.load %arg3[%c0_3, %c0_4] : memref<8x1xf32, #tpu.memory_space<vmem>>, vector<8x1xf32>
    %4 = vector.broadcast %3 : vector<8x1xf32> to vector<8x1024xf32>
    %5 = arith.addf %2, %4 : vector<8x1024xf32>
    %c0_5 = arith.constant 0 : index
    %c0_6 = arith.constant 0 : index
    %c0_7 = arith.constant 0 : index
    %6 = vector.load %arg4[%c0_5, %c0_6, %c0_7] : memref<1x8x1024xf32, #tpu.memory_space<vmem>>, vector<1x8x1024xf32>
    %7 = vector.shape_cast %6 : vector<1x8x1024xf32> to vector<8x1024xf32>
    %8 = vector.shape_cast %5 : vector<8x1024xf32> to vector<1x8x1024xf32>
    tpu.vector_store %arg4[%c0_5, %c0_6, %c0_7], %8 {strides = array<i32>} : memref<1x8x1024xf32, #tpu.memory_space<vmem>>, vector<1x8x1024xf32>,
    return
  }
  func.func @transform_0(%arg0: i32) -> (i32, i32) {
    %c0_i32 = arith.constant 0 : i32
    %c0_i32_0 = arith.constant 0 : i32
    return %c0_i32, %arg0 : i32, i32
  }
  func.func @transform_1(%arg0: i32) -> (i32, i32) {
    %c0_i32 = arith.constant 0 : i32
    %c0_i32_0 = arith.constant 0 : i32
    %c0_i32_1 = arith.constant 0 : i32
    return %c0_i32, %c0_i32_0 : i32, i32
  }
  func.func @transform_2(%arg0: i32) -> (i32, i32) {
    %c0_i32 = arith.constant 0 : i32
    %c0_i32_0 = arith.constant 0 : i32
    %c0_i32_1 = arith.constant 0 : i32
    return %c0_i32, %c0_i32_0 : i32, i32
  }
  func.func @transform_3(%arg0: i32) -> (i32, i32, i32) {
    %c0_i32 = arith.constant 0 : i32
    %c0_i32_0 = arith.constant 0 : i32
    %c0_i32_1 = arith.constant 0 : i32
    return %arg0, %c0_i32, %c0_i32_0 : i32, i32, i32
  }
}

</mosaic_0001>

<llo_original>
// kernel: tpu_custom_call.1
$region0: #{tpu_custom_call.1}
  #allocation0 [shape = 'u32[]', space=smem, size = 0x4, offset = 0x4, fixed_abs, tag = 'smem constant byte address 0x4 - core index']
  #allocation1 [shape = 'u32[144,128]{1,0:T(1,128)}', space=vmem, size = 0x12000, scoped, tag = 'internal scratch']
  %s0 = inlined_call_operand.hbm [shape: f32[64,2048], index: 0, kind: input, shape index: {}]
  %s1 = inlined_call_operand.vmem [shape: f32[8,64], index: 1, kind: input, shape index: {}]
  %s2 = inlined_call_operand.vmem [shape: f32[8,1], index: 2, kind: input, shape index: {}]
  %s3 = inlined_call_operand.hbm [shape: f32[2,8,1024], index: 3, kind: output, shape index: {}]
  %s4 = sld [smem:[#allocation0]]
  $region49: #{tpu_custom_call.1} parent=0
    _
  %s6 = ssub.s32 1, %s4
  %s7 = scalar_select 0, %s6, %s4
  $region1: #{tpu_custom_call.1} parent=0
    #allocation2 [shape = 'u8[524288]{0}', space=vmem, size = 0x80000, scoped, tag = 'input window, operand 0']
    #allocation3 [shape = 's32[2]{0}', space=sflag, size = 0x8, scoped, tag = 'scoped memory for tpu_custom_call.1']
    #allocation4 [shape = 's32[2]{0}', space=sflag, size = 0x8, scoped, tag = 'scoped memory for tpu_custom_call.1']
    #allocation5 [shape = 'u8[65536]{0}', space=vmem, size = 0x10000, scoped, tag = 'output window, operand 0']
    %8 = vsyncpa [#allocation3], 0
    %s9 = scalar_lea.sflag [#allocation3], 1
    %10 = vsyncpa %s9, 0
    %11 = vsyncpa [#allocation4], 0
    %s12 = scalar_lea.sflag [#allocation4], 1
    %13 = vsyncpa %s12, 0
    loop: start=0, step=1, limit=4
    $region2: #{tpu_custom_call.1} parent=1 // loop_pre_header
      _
    $region3: #{tpu_custom_call.1} parent=1 // loop_header
      %s15 = sphi 0, %s19
      %p16 = scmp.ge.s32.totalorder %s15, 4
      %s25 = sphi 0, %s27
      %s28 = sphi 0, %s25
      %s29 = sphi 0, %s28
      %s45 = sphi 0, %s29
      %s49 = sphi 0, %s49
      %s51 = sphi 0, %s49
      %s52 = sphi 0, %s51
      %s66 = sphi 0, %s52
      %s70 = sphi 0, %s70
      %s72 = sphi 0, %s70
      %s73 = sphi 0, %s72
      %s87 = sphi 0, %s73
      %s93 = sphi 0, %s95
      %s96 = sphi 0, %s93
      %s97 = sphi 0, %s96
      %s113 = sphi 0, %s97
    $region4: #{tpu_custom_call.1} parent=1 // loop_header_branch
      %18 = sbr.rel (%p16) target = $region8
    $region5: #{tpu_custom_call.1} parent=1 // loop_body
      %s20 = ssub.s32 %s15, 1
      %s21 = ssub.s32 %s15, 2
      %s22 = sadd.s32 %s15, 1
      %s23 = ssub.s32 %s15, %s22
      %p24 = scmp.eq.s32.totalorder %s23, 0
      %s26 = sadd.s32 %s25, 1
      %s27 = scalar_select %p24, %s25, %s26
      %p30 = pneg %p24
      %p31 = scmp.eq.s32.totalorder %s15, 1
      %p32 = por %p30, %p31
      %p33 = scmp.ne.s32.totalorder %s25, %s28
      %p34 = scmp.eq.s32.totalorder %s15, 0
      %p35 = por %p33, %p34
      %p36 = scmp.ne.s32.totalorder %s25, %s28
      %p37 = scmp.eq.s32.totalorder %s20, 1
      %p38 = por %p36, %p37
      %p39 = scmp.ne.s32.totalorder %s28, %s29
      %p40 = scmp.eq.s32.totalorder %s20, 0
      %p41 = por %p39, %p40
      %p42 = scmp.ne.s32.totalorder %s28, %s29
      %p43 = scmp.eq.s32.totalorder %s21, 1
      %p44 = por %p42, %p43
      %p46 = scmp.ne.s32.totalorder %s29, %s45
      %p47 = scmp.eq.s32.totalorder %s21, 0
      %p48 = por %p46, %p47
      %s50 = sadd.s32 %s49, 1
      %p53 = scmp.eq.s32.totalorder %s15, 1
      %p54 = scmp.ne.s32.totalorder %s49, %s51
      %p55 = scmp.eq.s32.totalorder %s15, 0
      %p56 = por %p54, %p55
      %p57 = scmp.ne.s32.totalorder %s49, %s51
      %p58 = scmp.eq.s32.totalorder %s20, 1
      %p59 = por %p57, %p58
      %p60 = scmp.ne.s32.totalorder %s51, %s52
      %p61 = scmp.eq.s32.totalorder %s20, 0
      %p62 = por %p60, %p61
      %p63 = scmp.ne.s32.totalorder %s51, %s52
      %p64 = scmp.eq.s32.totalorder %s21, 1
      %p65 = por %p63, %p64
      %p67 = scmp.ne.s32.totalorder %s52, %s66
      %p68 = scmp.eq.s32.totalorder %s21, 0
      %p69 = por %p67, %p68
      %s71 = sadd.s32 %s70, 1
      %p74 = scmp.eq.s32.totalorder %s15, 1
      %p75 = scmp.ne.s32.totalorder %s70, %s72
      %p76 = scmp.eq.s32.totalorder %s15, 0
      %p77 = por %p75, %p76
      %p78 = scmp.ne.s32.totalorder %s70, %s72
      %p79 = scmp.eq.s32.totalorder %s20, 1
      %p80 = por %p78, %p79
      %p81 = scmp.ne.s32.totalorder %s72, %s73
      %p82 = scmp.eq.s32.totalorder %s20, 0
      %p83 = por %p81, %p82
      %p84 = scmp.ne.s32.totalorder %s72, %s73
      %p85 = scmp.eq.s32.totalorder %s21, 1
      %p86 = por %p84, %p85
      %p88 = scmp.ne.s32.totalorder %s73, %s87
      %p89 = scmp.eq.s32.totalorder %s21, 0
      %p90 = por %p88, %p89
      %s91 = ssub.s32 %s15, %s22
      %p92 = scmp.eq.s32.totalorder %s91, 0
      %s94 = sadd.s32 %s93, 1
      %s95 = scalar_select %p92, %s93, %s94
      %p98 = pneg %p92
      %p99 = scmp.eq.s32.totalorder %s15, 1
      %p100 = por %p98, %p99
      %p101 = scmp.ne.s32.totalorder %s93, %s96
      %p102 = scmp.eq.s32.totalorder %s15, 0
      %p103 = por %p101, %p102
      %p104 = scmp.ne.s32.totalorder %s93, %s96
      %p105 = scmp.eq.s32.totalorder %s20, 1
      %p106 = por %p104, %p105
      %p107 = scmp.ne.s32.totalorder %s96, %s97
      %p108 = scmp.eq.s32.totalorder %s20, 0
      %p109 = por %p107, %p108
      %p110 = scmp.ne.s32.totalorder %s96, %s97
      %p111 = scmp.eq.s32.totalorder %s21, 1
      %p112 = por %p110, %p111
      %p114 = scmp.ne.s32.totalorder %s97, %s113
      %p115 = scmp.eq.s32.totalorder %s21, 0
      %p116 = por %p114, %p115
      %p117 = scmp.le.s32.totalorder 1, %s15
      %p118 = scmp.lt.s32.totalorder %s15, 3
      %p119 = pnand %p117, %p118
      %p120 = pneg %p119
      // Predicated region
      $region9: #{tpu_custom_call.1} parent=5 // pred_check
        _
      $region10: #{tpu_custom_call.1} parent=5 // pred_check_branch
        %122 = sbr.rel (%p119) target = $region12
      $region11: #{tpu_custom_call.1} parent=5 // pred_region
        %s123 = ssub.s32 %s15, 1
        // Predicated region
        $region13: #{tpu_custom_call.1} parent=11 // pred_check
          %p124 = pneg %p62
        $region14: #{tpu_custom_call.1} parent=11 // pred_check_branch
          %126 = sbr.rel (%p124) target = $region16
        $region15: #{tpu_custom_call.1} parent=11 // pred_region
          _
        $region16: #{tpu_custom_call.1} parent=11 // pred_fallthru
          _
        // Predicated region
        $region17: #{tpu_custom_call.1} parent=11 // pred_check
          %p127 = pneg %p83
        $region18: #{tpu_custom_call.1} parent=11 // pred_check_branch
          %129 = sbr.rel (%p127) target = $region20
        $region19: #{tpu_custom_call.1} parent=11 // pred_region
          _
        $region20: #{tpu_custom_call.1} parent=11 // pred_fallthru
          _
      $region12: #{tpu_custom_call.1} parent=5 // pred_fallthru
        _
      %p130 = scmp.lt.s32.totalorder %s15, 2
      // Predicated region
      $region21: #{tpu_custom_call.1} parent=5 // pred_check
        %p131 = pneg %p130
      $region22: #{tpu_custom_call.1} parent=5 // pred_check_branch
        %133 = sbr.rel (%p131) target = $region24
      $region23: #{tpu_custom_call.1} parent=5 // pred_region
        // Predicated region
        $region25: #{tpu_custom_call.1} parent=23 // pred_check
          %p134 = pneg %p35
        $region26: #{tpu_custom_call.1} parent=23 // pred_check_branch
          %136 = sbr.rel (%p134) target = $region28
        $region27: #{tpu_custom_call.1} parent=23 // pred_region
          %s137 = sand.u32 %s25, 1
          %s138 = scalar_lea.sflag [#allocation3], %s137
          %s139 = sand.u32 %s25, 1
          %s140 = smul.addr %s139, 512
          %s141 = scalar_lea.vmem [#allocation2], %s140
          %s142 = smul.u32 8, %s15
          %s144 = ssub.s32 8192, 8192
          %145 = vsyncadd %s138, %s144
          %s146 = smul.addr %s142, 128
          %s147 = scalar_lea.hbm %s0, %s146
          %s148 = sshll.u32 %s141, 4
          %s149 = int_to_ptr.vmem [resolvable:$true] %s148
          %154 = dma.hbm_to_vmem [thread:$0]  %s147, 8192, %s149, %s138, 2048, 1024, 64
        $region28: #{tpu_custom_call.1} parent=23 // pred_fallthru
          _
      $region24: #{tpu_custom_call.1} parent=5 // pred_fallthru
        _
      %p155 = scmp.le.s32.totalorder 1, %s15
      %p156 = scmp.lt.s32.totalorder %s15, 3
      %p157 = pnand %p155, %p156
      %p158 = pneg %p157
      // Predicated region
      $region29: #{tpu_custom_call.1} parent=5 // pred_check
        _
      $region30: #{tpu_custom_call.1} parent=5 // pred_check_branch
        %160 = sbr.rel (%p157) target = $region32
      $region31: #{tpu_custom_call.1} parent=5 // pred_region
        %s161 = ssub.s32 %s15, 1
        %s162 = sand.u32 %s28, 1
        %s163 = scalar_lea.sflag [#allocation3], %s162
        %s164 = sand.u32 %s28, 1
        %s165 = smul.addr %s164, 512
        %s166 = scalar_lea.vmem [#allocation2], %s165
        // Predicated region
        $region33: #{tpu_custom_call.1} parent=31 // pred_check
          %p167 = pneg %p41
        $region34: #{tpu_custom_call.1} parent=31 // pred_check_branch
          %169 = sbr.rel (%p167) target = $region36
        $region35: #{tpu_custom_call.1} parent=31 // pred_region
          %170 = dma.done %s163, 8192
        $region36: #{tpu_custom_call.1} parent=31 // pred_fallthru
          _
        %s171 = sand.u32 %s28, 1
        %s172 = scalar_lea.sflag [#allocation3], %s171
        %s173 = sand.u32 %s28, 1
        %s174 = smul.addr %s173, 512
        %s175 = scalar_lea.vmem [#allocation2], %s174
        %p176 = pneg %p41
        %p177 = pneg %p38
        %p178 = pneg %p62
        %p179 = pneg %p59
        %p180 = pneg %p83
        %p181 = pneg %p80
        %p182 = pneg %p109
        %p183 = pneg %p106
        %s184 = sand.u32 %s96, 1
        %s185 = scalar_lea.sflag [#allocation4], %s184
        %s186 = sand.u32 %s96, 1
        %s187 = smul.addr %s186, 64
        %s188 = scalar_lea.vmem [#allocation5], %s187
        %s189 = smul.u32 8, %s20
        %v190 = vld [vmem:[%s1] sm:$0xff]
        %v191 = vld [vmem:[%s166] sm:$0xff]
        %v192 = vld [vmem:[%s166 + $0x8] sm:$0xff]
        %v193 = vld [vmem:[%s166 + $0x10] sm:$0xff]
        %v194 = vld [vmem:[%s166 + $0x18] sm:$0xff]
        %v195 = vld [vmem:[%s166 + $0x20] sm:$0xff]
        %v196 = vld [vmem:[%s166 + $0x28] sm:$0xff]
        %v197 = vld [vmem:[%s166 + $0x30] sm:$0xff]
        %v198 = vld [vmem:[%s166 + $0x38] sm:$0xff]
        %v199 = vld [vmem:[%s166 + $0x40] sm:$0xff]
        %v200 = vld [vmem:[%s166 + $0x48] sm:$0xff]
        %v201 = vld [vmem:[%s166 + $0x50] sm:$0xff]
        %v202 = vld [vmem:[%s166 + $0x58] sm:$0xff]
        %v203 = vld [vmem:[%s166 + $0x60] sm:$0xff]
        %v204 = vld [vmem:[%s166 + $0x68] sm:$0xff]
        %v205 = vld [vmem:[%s166 + $0x70] sm:$0xff]
        %v206 = vld [vmem:[%s166 + $0x78] sm:$0xff]
        %v207 = vld [vmem:[%s166 + $0x80] sm:$0xff]
        %v208 = vld [vmem:[%s166 + $0x88] sm:$0xff]
        %v209 = vld [vmem:[%s166 + $0x90] sm:$0xff]
        %v210 = vld [vmem:[%s166 + $0x98] sm:$0xff]
        %v211 = vld [vmem:[%s166 + $0xa0] sm:$0xff]
        %v212 = vld [vmem:[%s166 + $0xa8] sm:$0xff]
        %v213 = vld [vmem:[%s166 + $0xb0] sm:$0xff]
        %v214 = vld [vmem:[%s166 + $0xb8] sm:$0xff]
        %v215 = vld [vmem:[%s166 + $0xc0] sm:$0xff]
        %v216 = vld [vmem:[%s166 + $0xc8] sm:$0xff]
        %v217 = vld [vmem:[%s166 + $0xd0] sm:$0xff]
        %v218 = vld [vmem:[%s166 + $0xd8] sm:$0xff]
        %v219 = vld [vmem:[%s166 + $0xe0] sm:$0xff]
        %v220 = vld [vmem:[%s166 + $0xe8] sm:$0xff]
        %v221 = vld [vmem:[%s166 + $0xf0] sm:$0xff]
        %v222 = vld [vmem:[%s166 + $0xf8] sm:$0xff]
        %v223 = vld [vmem:[%s166 + $0x100] sm:$0xff]
        %v224 = vld [vmem:[%s166 + $0x108] sm:$0xff]
        %v225 = vld [vmem:[%s166 + $0x110] sm:$0xff]
        %v226 = vld [vmem:[%s166 + $0x118] sm:$0xff]
        %v227 = vld [vmem:[%s166 + $0x120] sm:$0xff]
        %v228 = vld [vmem:[%s166 + $0x128] sm:$0xff]
        %v229 = vld [vmem:[%s166 + $0x130] sm:$0xff]
        %v230 = vld [vmem:[%s166 + $0x138] sm:$0xff]
        %v231 = vld [vmem:[%s166 + $0x140] sm:$0xff]
        %v232 = vld [vmem:[%s166 + $0x148] sm:$0xff]
        %v233 = vld [vmem:[%s166 + $0x150] sm:$0xff]
        %v234 = vld [vmem:[%s166 + $0x158] sm:$0xff]
        %v235 = vld [vmem:[%s166 + $0x160] sm:$0xff]
        %v236 = vld [vmem:[%s166 + $0x168] sm:$0xff]
        %v237 = vld [vmem:[%s166 + $0x170] sm:$0xff]
        %v238 = vld [vmem:[%s166 + $0x178] sm:$0xff]
        %v239 = vld [vmem:[%s166 + $0x180] sm:$0xff]
        %v240 = vld [vmem:[%s166 + $0x188] sm:$0xff]
        %v241 = vld [vmem:[%s166 + $0x190] sm:$0xff]
        %v242 = vld [vmem:[%s166 + $0x198] sm:$0xff]
        %v243 = vld [vmem:[%s166 + $0x1a0] sm:$0xff]
        %v244 = vld [vmem:[%s166 + $0x1a8] sm:$0xff]
        %v245 = vld [vmem:[%s166 + $0x1b0] sm:$0xff]
        %v246 = vld [vmem:[%s166 + $0x1b8] sm:$0xff]
        %v247 = vld [vmem:[%s166 + $0x1c0] sm:$0xff]
        %v248 = vld [vmem:[%s166 + $0x1c8] sm:$0xff]
        %v249 = vld [vmem:[%s166 + $0x1d0] sm:$0xff]
        %v250 = vld [vmem:[%s166 + $0x1d8] sm:$0xff]
        %v251 = vld [vmem:[%s166 + $0x1e0] sm:$0xff]
        %v252 = vld [vmem:[%s166 + $0x1e8] sm:$0xff]
        %v253 = vld [vmem:[%s166 + $0x1f0] sm:$0xff]
        %v254 = vld [vmem:[%s166 + $0x1f8] sm:$0xff]
        %v255 = vld [vmem:[%s2] sm:$0xff]
        %257 = vset.pattern.permute.xlu0 0
        %258 = vperm.xlu0 %257, %v255
        %v259 = vpop.permute.xlu0 %258
        %vm261 = vcmask 523264
        %v263 = vsel %vm261, %v190, 0
        %265 = vmatprep.subr.mxu0 %v192
        %266 = vmatpush1.msra.mxu0 %v191
        %267 = vmatprep.subr.mxu0 %v200
        %268 = vmatpush1.msra.mxu0 %v199
        %269 = vmatprep.subr.mxu0 %v208
        %270 = vmatpush1.msra.mxu0 %v207
        %271 = vmatprep.subr.mxu0 %v216
        %272 = vmatpush1.msra.mxu0 %v215
        %273 = vmatprep.subr.mxu0 %v224
        %274 = vmatpush1.msra.mxu0 %v223
        %275 = vmatprep.subr.mxu0 %v232
        %276 = vmatpush1.msra.mxu0 %v231
        %277 = vmatprep.subr.mxu0 %v240
        %278 = vmatpush1.msra.mxu0 %v239
        %279 = vmatprep.subr.mxu0 %v248
        %280 = vmatpush1.msra.mxu0 %v247
        %281 = vmatprep.subr.mxu0 0.0
        %282 = vmatpush1.msra.mxu0 0.0
        %283 = vmatprep.subr.mxu0 0.0
        %284 = vmatpush1.msra.mxu0 0.0
        %285 = vmatprep.subr.mxu0 0.0
        %286 = vmatpush1.msra.mxu0 0.0
        %287 = vmatprep.subr.mxu0 0.0
        %288 = vmatpush1.msra.mxu0 0.0
        %289 = vmatprep.subr.mxu0 0.0
        %290 = vmatpush1.msra.mxu0 0.0
        %291 = vmatprep.subr.mxu0 0.0
        %292 = vmatpush1.msra.mxu0 0.0
        %293 = vmatprep.subr.mxu0 0.0
        %294 = vmatpush1.msra.mxu0 0.0
        %295 = vmatprep.subr.mxu0 0.0
        %296 = vmatpush1.msra.mxu0 0.0
        %297 = vmatprep.subr.mxu0 0.0
        %298 = vmatpush1.msra.mxu0 0.0
        %299 = vmatprep.subr.mxu0 0.0
        %300 = vmatpush1.msra.mxu0 0.0
        %301 = vmatprep.subr.mxu0 0.0
        %302 = vmatpush1.msra.mxu0 0.0
        %303 = vmatprep.subr.mxu0 0.0
        %304 = vmatpush1.msra.mxu0 0.0
        %305 = vmatprep.subr.mxu0 0.0
        %306 = vmatpush1.msra.mxu0 0.0
        %307 = vmatprep.subr.mxu0 0.0
        %308 = vmatpush1.msra.mxu0 0.0
        %309 = vmatprep.subr.mxu0 0.0
        %310 = vmatpush1.msra.mxu0 0.0
        %311 = vmatprep.subr.mxu0 0.0
        %312 = vmatpush1.msra.mxu0 0.0
        %313 = vmatprep.subr.mxu0 0.0
        %314 = vmatpush1.msra.mxu0 0.0
        %315 = vmatprep.subr.mxu0 0.0
        %316 = vmatpush1.msra.mxu0 0.0
        %317 = vmatprep.subr.mxu0 0.0
        %318 = vmatpush1.msra.mxu0 0.0
        %319 = vmatprep.subr.mxu0 0.0
        %320 = vmatpush1.msra.mxu0 0.0
        %321 = vmatprep.subr.mxu0 0.0
        %322 = vmatpush1.msra.mxu0 0.0
        %323 = vmatprep.subr.mxu0 0.0
        %324 = vmatpush1.msra.mxu0 0.0
        %325 = vmatprep.subr.mxu0 0.0
        %326 = vmatpush1.msra.mxu0 0.0
        %327 = vmatprep.subr.mxu0 0.0
        %328 = vmatpush1.msra.mxu0 0.0
        %329 = vmatprep.mubr.f32.mxu0 0.0
        %330 = vmatmul.mubr.f32.gmra.mrb[0].mxu0 %v263
        %v331 = vpop.f32.mrb[0].mxu0
        %v332 = vadd.f32 %v259, %v331
        %v333 = vpop.f32.mrb[0].mxu0
        %v334 = vadd.f32 %v259, %v333
        %335 = vdwg.mxu0
        %336 = vmatprep.subr.mxu0 %v194
        %337 = vmatpush1.msra.mxu0 %v193
        %338 = vmatprep.subr.mxu0 %v202
        %339 = vmatpush1.msra.mxu0 %v201
        %340 = vmatprep.subr.mxu0 %v210
        %341 = vmatpush1.msra.mxu0 %v209
        %342 = vmatprep.subr.mxu0 %v218
        %343 = vmatpush1.msra.mxu0 %v217
        %344 = vmatprep.subr.mxu0 %v226
        %345 = vmatpush1.msra.mxu0 %v225
        %346 = vmatprep.subr.mxu0 %v234
        %347 = vmatpush1.msra.mxu0 %v233
        %348 = vmatprep.subr.mxu0 %v242
        %349 = vmatpush1.msra.mxu0 %v241
        %350 = vmatprep.subr.mxu0 %v250
        %351 = vmatpush1.msra.mxu0 %v249
        %352 = vmatprep.subr.mxu0 0.0
        %353 = vmatpush1.msra.mxu0 0.0
        %354 = vmatprep.subr.mxu0 0.0
        %355 = vmatpush1.msra.mxu0 0.0
        %356 = vmatprep.subr.mxu0 0.0
        %357 = vmatpush1.msra.mxu0 0.0
        %358 = vmatprep.subr.mxu0 0.0
        %359 = vmatpush1.msra.mxu0 0.0
        %360 = vmatprep.subr.mxu0 0.0
        %361 = vmatpush1.msra.mxu0 0.0
        %362 = vmatprep.subr.mxu0 0.0
        %363 = vmatpush1.msra.mxu0 0.0
        %364 = vmatprep.subr.mxu0 0.0
        %365 = vmatpush1.msra.mxu0 0.0
        %366 = vmatprep.subr.mxu0 0.0
        %367 = vmatpush1.msra.mxu0 0.0
        %368 = vmatprep.subr.mxu0 0.0
        %369 = vmatpush1.msra.mxu0 0.0
        %370 = vmatprep.subr.mxu0 0.0
        %371 = vmatpush1.msra.mxu0 0.0
        %372 = vmatprep.subr.mxu0 0.0
        %373 = vmatpush1.msra.mxu0 0.0
        %374 = vmatprep.subr.mxu0 0.0
        %375 = vmatpush1.msra.mxu0 0.0
        %376 = vmatprep.subr.mxu0 0.0
        %377 = vmatpush1.msra.mxu0 0.0
        %378 = vmatprep.subr.mxu0 0.0
        %379 = vmatpush1.msra.mxu0 0.0
        %380 = vmatprep.subr.mxu0 0.0
        %381 = vmatpush1.msra.mxu0 0.0
        %382 = vmatprep.subr.mxu0 0.0
        %383 = vmatpush1.msra.mxu0 0.0
        %384 = vmatprep.subr.mxu0 0.0
        %385 = vmatpush1.msra.mxu0 0.0
        %386 = vmatprep.subr.mxu0 0.0
        %387 = vmatpush1.msra.mxu0 0.0
        %388 = vmatprep.subr.mxu0 0.0
        %389 = vmatpush1.msra.mxu0 0.0
        %390 = vmatprep.subr.mxu0 0.0
        %391 = vmatpush1.msra.mxu0 0.0
        %392 = vmatprep.subr.mxu0 0.0
        %393 = vmatpush1.msra.mxu0 0.0
        %394 = vmatprep.subr.mxu0 0.0
        %395 = vmatpush1.msra.mxu0 0.0
        %396 = vmatprep.subr.mxu0 0.0
        %397 = vmatpush1.msra.mxu0 0.0
        %398 = vmatprep.subr.mxu0 0.0
        %399 = vmatpush1.msra.mxu0 0.0
        %400 = vmatprep.mubr.f32.mxu0 0.0
        %401 = vmatmul.mubr.f32.gmra.mrb[0].mxu0 %v263
        %v402 = vpop.f32.mrb[0].mxu0
        %v403 = vadd.f32 %v259, %v402
        %v404 = vpop.f32.mrb[0].mxu0
        %v405 = vadd.f32 %v259, %v404
        %406 = vdwg.mxu0
        %407 = vmatprep.subr.mxu0 %v196
        %408 = vmatpush1.msra.mxu0 %v195
        %409 = vmatprep.subr.mxu0 %v204
        %410 = vmatpush1.msra.mxu0 %v203
        %411 = vmatprep.subr.mxu0 %v212
        %412 = vmatpush1.msra.mxu0 %v211
        %413 = vmatprep.subr.mxu0 %v220
        %414 = vmatpush1.msra.mxu0 %v219
        %415 = vmatprep.subr.mxu0 %v228
        %416 = vmatpush1.msra.mxu0 %v227
        %417 = vmatprep.subr.mxu0 %v236
        %418 = vmatpush1.msra.mxu0 %v235
        %419 = vmatprep.subr.mxu0 %v244
        %420 = vmatpush1.msra.mxu0 %v243
        %421 = vmatprep.subr.mxu0 %v252
        %422 = vmatpush1.msra.mxu0 %v251
        %423 = vmatprep.subr.mxu0 0.0
        %424 = vmatpush1.msra.mxu0 0.0
        %425 = vmatprep.subr.mxu0 0.0
        %426 = vmatpush1.msra.mxu0 0.0
        %427 = vmatprep.subr.mxu0 0.0
        %428 = vmatpush1.msra.mxu0 0.0
        %429 = vmatprep.subr.mxu0 0.0
        %430 = vmatpush1.msra.mxu0 0.0
        %431 = vmatprep.subr.mxu0 0.0
        %432 = vmatpush1.msra.mxu0 0.0
        %433 = vmatprep.subr.mxu0 0.0
        %434 = vmatpush1.msra.mxu0 0.0
        %435 = vmatprep.subr.mxu0 0.0
        %436 = vmatpush1.msra.mxu0 0.0
        %437 = vmatprep.subr.mxu0 0.0
        %438 = vmatpush1.msra.mxu0 0.0
        %439 = vmatprep.subr.mxu0 0.0
        %440 = vmatpush1.msra.mxu0 0.0
        %441 = vmatprep.subr.mxu0 0.0
        %442 = vmatpush1.msra.mxu0 0.0
        %443 = vmatprep.subr.mxu0 0.0
        %444 = vmatpush1.msra.mxu0 0.0
        %445 = vmatprep.subr.mxu0 0.0
        %446 = vmatpush1.msra.mxu0 0.0
        %447 = vmatprep.subr.mxu0 0.0
        %448 = vmatpush1.msra.mxu0 0.0
        %449 = vmatprep.subr.mxu0 0.0
        %450 = vmatpush1.msra.mxu0 0.0
        %451 = vmatprep.subr.mxu0 0.0
        %452 = vmatpush1.msra.mxu0 0.0
        %453 = vmatprep.subr.mxu0 0.0
        %454 = vmatpush1.msra.mxu0 0.0
        %455 = vmatprep.subr.mxu0 0.0
        %456 = vmatpush1.msra.mxu0 0.0
        %457 = vmatprep.subr.mxu0 0.0
        %458 = vmatpush1.msra.mxu0 0.0
        %459 = vmatprep.subr.mxu0 0.0
        %460 = vmatpush1.msra.mxu0 0.0
        %461 = vmatprep.subr.mxu0 0.0
        %462 = vmatpush1.msra.mxu0 0.0
        %463 = vmatprep.subr.mxu0 0.0
        %464 = vmatpush1.msra.mxu0 0.0
        %465 = vmatprep.subr.mxu0 0.0
        %466 = vmatpush1.msra.mxu0 0.0
        %467 = vmatprep.subr.mxu0 0.0
        %468 = vmatpush1.msra.mxu0 0.0
        %469 = vmatprep.subr.mxu0 0.0
        %470 = vmatpush1.msra.mxu0 0.0
        %471 = vmatprep.mubr.f32.mxu0 0.0
        %472 = vmatmul.mubr.f32.gmra.mrb[0].mxu0 %v263
        %v473 = vpop.f32.mrb[0].mxu0
        %v474 = vadd.f32 %v259, %v473
        %v475 = vpop.f32.mrb[0].mxu0
        %v476 = vadd.f32 %v259, %v475
        %477 = vdwg.mxu0
        %478 = vmatprep.subr.mxu0 %v198
        %479 = vmatpush1.msra.mxu0 %v197
        %480 = vmatprep.subr.mxu0 %v206
        %481 = vmatpush1.msra.mxu0 %v205
        %482 = vmatprep.subr.mxu0 %v214
        %483 = vmatpush1.msra.mxu0 %v213
        %484 = vmatprep.subr.mxu0 %v222
        %485 = vmatpush1.msra.mxu0 %v221
        %486 = vmatprep.subr.mxu0 %v230
        %487 = vmatpush1.msra.mxu0 %v229
        %488 = vmatprep.subr.mxu0 %v238
        %489 = vmatpush1.msra.mxu0 %v237
        %490 = vmatprep.subr.mxu0 %v246
        %491 = vmatpush1.msra.mxu0 %v245
        %492 = vmatprep.subr.mxu0 %v254
        %493 = vmatpush1.msra.mxu0 %v253
        %494 = vmatprep.subr.mxu0 0.0
        %495 = vmatpush1.msra.mxu0 0.0
        %496 = vmatprep.subr.mxu0 0.0
        %497 = vmatpush1.msra.mxu0 0.0
        %498 = vmatprep.subr.mxu0 0.0
        %499 = vmatpush1.msra.mxu0 0.0
        %500 = vmatprep.subr.mxu0 0.0
        %501 = vmatpush1.msra.mxu0 0.0
        %502 = vmatprep.subr.mxu0 0.0
        %503 = vmatpush1.msra.mxu0 0.0
        %504 = vmatprep.subr.mxu0 0.0
        %505 = vmatpush1.msra.mxu0 0.0
        %506 = vmatprep.subr.mxu0 0.0
        %507 = vmatpush1.msra.mxu0 0.0
        %508 = vmatprep.subr.mxu0 0.0
        %509 = vmatpush1.msra.mxu0 0.0
        %510 = vmatprep.subr.mxu0 0.0
        %511 = vmatpush1.msra.mxu0 0.0
        %512 = vmatprep.subr.mxu0 0.0
        %513 = vmatpush1.msra.mxu0 0.0
        %514 = vmatprep.subr.mxu0 0.0
        %515 = vmatpush1.msra.mxu0 0.0
        %516 = vmatprep.subr.mxu0 0.0
        %517 = vmatpush1.msra.mxu0 0.0
        %518 = vmatprep.subr.mxu0 0.0
        %519 = vmatpush1.msra.mxu0 0.0
        %520 = vmatprep.subr.mxu0 0.0
        %521 = vmatpush1.msra.mxu0 0.0
        %522 = vmatprep.subr.mxu0 0.0
        %523 = vmatpush1.msra.mxu0 0.0
        %524 = vmatprep.subr.mxu0 0.0
        %525 = vmatpush1.msra.mxu0 0.0
        %526 = vmatprep.subr.mxu0 0.0
        %527 = vmatpush1.msra.mxu0 0.0
        %528 = vmatprep.subr.mxu0 0.0
        %529 = vmatpush1.msra.mxu0 0.0
        %530 = vmatprep.subr.mxu0 0.0
        %531 = vmatpush1.msra.mxu0 0.0
        %532 = vmatprep.subr.mxu0 0.0
        %533 = vmatpush1.msra.mxu0 0.0
        %534 = vmatprep.subr.mxu0 0.0
        %535 = vmatpush1.msra.mxu0 0.0
        %536 = vmatprep.subr.mxu0 0.0
        %537 = vmatpush1.msra.mxu0 0.0
        %538 = vmatprep.subr.mxu0 0.0
        %539 = vmatpush1.msra.mxu0 0.0
        %540 = vmatprep.subr.mxu0 0.0
        %541 = vmatpush1.msra.mxu0 0.0
        %542 = vmatprep.mubr.f32.mxu0 0.0
        %543 = vmatmul.mubr.f32.gmra.mrb[0].mxu0 %v263
        %v544 = vpop.f32.mrb[0].mxu0
        %v545 = vadd.f32 %v259, %v544
        %v546 = vpop.f32.mrb[0].mxu0
        %v547 = vadd.f32 %v259, %v546
        %548 = vdwg.mxu0
        %549 = vst [vmem:[%s188] sm:$0xff] %v332
        %550 = vst [vmem:[%s188 + $0x8] sm:$0xff] %v334
        %551 = vst [vmem:[%s188 + $0x10] sm:$0xff] %v403
        %552 = vst [vmem:[%s188 + $0x18] sm:$0xff] %v405
        %553 = vst [vmem:[%s188 + $0x20] sm:$0xff] %v474
        %554 = vst [vmem:[%s188 + $0x28] sm:$0xff] %v476
        %555 = vst [vmem:[%s188 + $0x30] sm:$0xff] %v545
        %556 = vst [vmem:[%s188 + $0x38] sm:$0xff] %v547
        %s557 = sand.u32 %s96, 1
        %s558 = scalar_lea.sflag [#allocation4], %s557
        %s559 = sand.u32 %s96, 1
        %s560 = smul.addr %s559, 64
        %s561 = scalar_lea.vmem [#allocation5], %s560
        // Predicated region
        $region37: #{tpu_custom_call.1} parent=31 // pred_check
          %p562 = pneg %p106
        $region38: #{tpu_custom_call.1} parent=31 // pred_check_branch
          %564 = sbr.rel (%p562) target = $region40
        $region39: #{tpu_custom_call.1} parent=31 // pred_region
          %s566 = ssub.s32 1024, 1024
          %567 = vsyncadd %s558, %s566
          %s568 = smul.addr %s20, 8
          %s569 = smul.addr %s568, 128
          %s570 = scalar_lea.hbm %s3, %s569
          %s572 = sshll.u32 %s561, 4
          %s573 = int_to_ptr.vmem [resolvable:$true] %s572
          %575 = dma.vmem_to_hbm [thread:$0]  %s573, 1024, %s570, %s558
        $region40: #{tpu_custom_call.1} parent=31 // pred_fallthru
          _
      $region32: #{tpu_custom_call.1} parent=5 // pred_fallthru
        _
      %p576 = scmp.le.s32.totalorder 2, %s15
      // Predicated region
      $region41: #{tpu_custom_call.1} parent=5 // pred_check
        %p577 = pneg %p576
      $region42: #{tpu_custom_call.1} parent=5 // pred_check_branch
        %579 = sbr.rel (%p577) target = $region44
      $region43: #{tpu_custom_call.1} parent=5 // pred_region
        %s580 = ssub.s32 %s15, 2
        // Predicated region
        $region45: #{tpu_custom_call.1} parent=43 // pred_check
          %p581 = pneg %p112
        $region46: #{tpu_custom_call.1} parent=43 // pred_check_branch
          %583 = sbr.rel (%p581) target = $region48
        $region47: #{tpu_custom_call.1} parent=43 // pred_region
          %s584 = sand.u32 %s97, 1
          %s585 = scalar_lea.sflag [#allocation4], %s584
          %s586 = sand.u32 %s97, 1
          %s587 = smul.addr %s586, 64
          %s588 = scalar_lea.vmem [#allocation5], %s587
          %589 = dma.done %s585, 1024
        $region48: #{tpu_custom_call.1} parent=43 // pred_fallthru
          _
      $region44: #{tpu_custom_call.1} parent=5 // pred_fallthru
        _
    $region6: #{tpu_custom_call.1} parent=1 // loop_footer
      %s19 = sadd.s32 1, %s15
    $region7: #{tpu_custom_call.1} parent=1 // loop_footer_branch
      %14 = sbr.rel target = $region3
    $region8: #{tpu_custom_call.1} parent=1 // loop_exit
      _
    %590 = vsyncpa [#allocation3], 1
    %s591 = scalar_lea.sflag [#allocation3], 1
    %592 = vsyncpa %s591, 1
    %593 = vsyncpa [#allocation4], 1
    %s594 = scalar_lea.sflag [#allocation4], 1
    %595 = vsyncpa %s594, 1

</llo_original>
